<compile_context>
chip_gen: v5e
topology: v5e:2x2
jax: 0.10.0
libtpu: 0.0.40
codegen_flags: <defaults>
</compile_context>

<pallas_src>
import functools

import jax
import jax.numpy as jnp
from jax.experimental import pallas as pl
from jax.experimental.pallas import tpu as pltpu

LANES = 128
ACC_SUBLANES = 32       # (32, 128) f32 partial accumulators = 4 vregs per acc
MAX_BLOCK_ROWS = 4096   # (4096, 128) f32 = 2 MiB; x2 inputs x2 buffers = 8 MiB


def _round_up(x: int, m: int) -> int:
    return ((x + m - 1) // m) * m


def _cdiv(a: int, b: int) -> int:
    return (a + b - 1) // b


def _device_tensorcores() -> int:
    """2 TensorCores per chip on v7x; 1 on v5e/v6e (safe default)."""
    try:
        kind = jax.devices()[0].device_kind.lower()
    except Exception:
        return 1
    return 2 if ("v7" in kind or "7x" in kind) else 1


def _make_kernel(order: int, rows: int, block_rows: int, steps_per_core: int,
                 acc_sublanes: int, use_approx_recip: bool):
    def _accumulate(pred, gt, valid, sum_ref, cnt_ref):
        safe_gt = jnp.where(valid, gt, 1.0)     # avoid div-by-zero on masked lanes
        if use_approx_recip:
            inv_gt = pl.reciprocal(safe_gt, approx=True)
        else:
            inv_gt = 1.0 / safe_gt
        err = jnp.abs(pred - inv_gt)
        errp = err
        for _ in range(order - 1):              # static integer power
            errp = errp * err
        masked_err = jnp.where(valid, errp, 0.0)
        mask_f = valid.astype(jnp.float32)
        # Vreg-consistent sublane-group partial reduce: (block_rows,128)->(32,128).
        # 4 independent per-vreg add chains; no cross-lane XLU reduce, no
        # scalar read-modify-write chain.
        sum_ref[...] += masked_err.reshape(-1, acc_sublanes, LANES).sum(axis=0)[None]
        cnt_ref[...] += mask_f.reshape(-1, acc_sublanes, LANES).sum(axis=0)[None]

    def disparity_loss_kernel(pred_ref, gt_ref, sum_ref, cnt_ref):
        c = pl.program_id(0)   # core axis (CORE_PARALLEL on v7x, size 1 otherwise)
        i = pl.program_id(1)   # streaming (reduction / arbitrary) axis

        @pl.when(i == 0)
        def _init():
            sum_ref[...] = jnp.zeros_like(sum_ref)
            cnt_ref[...] = jnp.zeros_like(cnt_ref)

        blk = c * steps_per_core + i
        row0 = blk * block_rows
        is_full = row0 + block_rows <= rows
        is_ragged = jnp.logical_and(row0 < rows, jnp.logical_not(is_full))
        # row0 >= rows -> clamp-duplicated block on the last core: skipped.

        @pl.when(is_full)
        def _fast():
            # Hot path: no iota / row-bounds mask, just gt > 0.
            gt = gt_ref[...].astype(jnp.float32)
            pred = pred_ref[...].astype(jnp.float32)
            _accumulate(pred, gt, gt > 0.0, sum_ref, cnt_ref)

        @pl.when(is_ragged)
        def _tail():
            # Ragged edge block: rows past `rows` contain undefined data and
            # must be masked; padded rows (gt == 0) are masked by gt > 0.
            gt = gt_ref[...].astype(jnp.float32)
            pred = pred_ref[...].astype(jnp.float32)
            row_idx = row0 + jax.lax.broadcasted_iota(
                jnp.int32, (block_rows, LANES), 0)
            valid = jnp.logical_and(row_idx < rows, gt > 0.0)
            _accumulate(pred, gt, valid, sum_ref, cnt_ref)

    return disparity_loss_kernel


@functools.partial(jax.jit, static_argnames=("order", "use_approx_reciprocal"))
def disparity_loss(prediction: jax.Array, gt: jax.Array, order: int = 2,
                   use_approx_reciprocal: bool = False) -> jax.Array:
    assert prediction.shape == gt.shape
    assert order >= 1

    # Keep native dtype; the kernel casts to f32 internally (halves DMA bytes
    # for bf16 inputs, no extra HBM pass for a wrapper-side cast).
    pred_flat = prediction.reshape(-1)
    gt_flat = gt.reshape(-1)
    n = pred_flat.shape[0]

    # Pad flat length to a multiple of 32*128 so every row block is a clean
    # multiple of the accumulator sublane group (gt padded with 0 is masked
    # out by gt > 0). No pad for already-aligned tensors.
    n_pad = _round_up(n, LANES * ACC_SUBLANES)
    if n_pad != n:
        pred_flat = jnp.pad(pred_flat, (0, n_pad - n))
        gt_flat = jnp.pad(gt_flat, (0, n_pad - n))

    rows = n_pad // LANES                      # multiple of 32
    pred2d = pred_flat.reshape(rows, LANES)
    gt2d = gt_flat.reshape(rows, LANES)

    block_rows = min(MAX_BLOCK_ROWS, rows)     # multiple of 32, <= rows
    total_blocks = _cdiv(rows, block_rows)

    # Core split: only v7x has 2 TensorCores; single-TC chips keep n_cores=1
    # so no clamp-duplicated tail block is ever DMA'd or processed.
    n_tc = _device_tensorcores()
    n_cores = n_tc if total_blocks >= n_tc else 1
    steps_per_core = _cdiv(total_blocks, n_cores)

    def in_map(c, i):
        # Clamp so the DMA always stays in-bounds; the duplicated tail block
        # (only possible on the last core when total_blocks is odd) is skipped
        # by the in-kernel pl.when guards.
        return (jnp.minimum(c * steps_per_core + i, total_blocks - 1), 0)

    out_map = lambda c, i: (c, 0, 0)

    if n_cores > 1:
        core_sem = getattr(pltpu, "CORE_PARALLEL", pltpu.PARALLEL)
    else:
        core_sem = pltpu.ARBITRARY
    dim_sem = (core_sem, pltpu.ARBITRARY)      # streaming axis is a reduction

    out_sum, out_cnt = pl.pallas_call(
        _make_kernel(order, rows, block_rows, steps_per_core,
                     ACC_SUBLANES, use_approx_reciprocal),
        out_shape=(
            jax.ShapeDtypeStruct((n_cores, ACC_SUBLANES, LANES), jnp.float32),
            jax.ShapeDtypeStruct((n_cores, ACC_SUBLANES, LANES), jnp.float32),
        ),
        grid_spec=pltpu.PrefetchScalarGridSpec(
            num_scalar_prefetch=0,
            grid=(n_cores, steps_per_core),
            in_specs=[
                pl.BlockSpec((block_rows, LANES), in_map),
                pl.BlockSpec((block_rows, LANES), in_map),
            ],
            out_specs=[
                pl.BlockSpec((1, ACC_SUBLANES, LANES), out_map),
                pl.BlockSpec((1, ACC_SUBLANES, LANES), out_map),
            ],
        ),
        compiler_params=pltpu.CompilerParams(dimension_semantics=dim_sem),
    )(pred2d, gt2d)

    # Tiny final cross-lane reduce + divide in plain JAX.
    # 0/0 -> NaN, matching torch.mean over an empty selection.
    return jnp.sum(out_sum) / jnp.sum(out_cnt)


def _reference(prediction, gt, order=2):
    mask = gt > 0
    inv_gt = jnp.where(mask, 1.0 / jnp.where(mask, gt, 1.0), 0.0)
    err = jnp.abs(prediction - inv_gt)
    errp = err ** order
    s = jnp.sum(jnp.where(mask, errp, 0.0))
    c = jnp.sum(mask.astype(jnp.float32))
    return s / c


if __name__ == "__main__":
    key = jax.random.PRNGKey(0)
    k1, k2, k3, k4, k5, k6 = jax.random.split(key, 6)

    # Primary test: NCHW inputs, like the PyTorch module would receive.
    shape = (2, 4, 16, 16)
    prediction = jax.random.normal(k1, shape, dtype=jnp.float32)
    gt = jax.random.uniform(k2, shape, dtype=jnp.float32, minval=-0.5, maxval=2.0)
    loss = disparity_loss(prediction, gt, order=2)
    jax.block_until_ready(loss)
    ref = _reference(prediction, gt, order=2)
    assert jnp.allclose(loss, ref, rtol=1e-4, atol=1e-6), (loss, ref)

    # Odd, non-lane-aligned shape (exercises the zero-pad + gt>0 masking).
    shape2 = (1, 3, 17, 19)
    p2 = jax.random.normal(k3, shape2, dtype=jnp.float32)
    g2 = jax.random.uniform(k4, shape2, dtype=jnp.float32, minval=-0.5, maxval=2.0)
    l2 = disparity_loss(p2, g2, order=2)
    jax.block_until_ready(l2)
    r2 = _reference(p2, g2, order=2)
    assert jnp.allclose(l2, r2, rtol=1e-4, atol=1e-6), (l2, r2)

    # Multi-block shape with a ragged last block: exercises the fast branch,
    # the masked tail branch, and accumulation across grid steps.
    shape3 = (2, 4, 260, 260)   # 540800 elems -> 4256 rows > 4096-row block
    p3 = jax.random.normal(k5, shape3, dtype=jnp.float32)
    g3 = jax.random.uniform(k6, shape3, dtype=jnp.float32, minval=-0.5, maxval=2.0)
    l3 = disparity_loss(p3, g3, order=2)
    jax.block_until_ready(l3)
    r3 = _reference(p3, g3, order=2)
    assert jnp.allclose(l3, r3, rtol=1e-4, atol=1e-6), (l3, r3)

    print("KERNEL_OK")
</pallas_src>

<mosaic_0001>
module attributes {stable_mosaic.version = 11 : i64} {
  func.func @disparity_loss_kernel(%arg0: i32, %arg1: i32, %arg2: memref<32x128xf32, #tpu.memory_space<vmem>>, %arg3: memref<32x128xf32, #tpu.memory_space<vmem>>, %arg4: memref<1x32x128xf32, #tpu.memory_space<vmem>>, %arg5: memref<1x32x128xf32, #tpu.memory_space<vmem>>) attributes {dimension_semantics = [#tpu.dimension_semantics<arbitrary>, #tpu.dimension_semantics<arbitrary>], iteration_bounds = array<i64: 1, 1>, scalar_prefetch = 0 : i64, scratch_operands = 0 : i64, tpu.core_type = #tpu.core_type<tc>, window_params = [{transform_indices = @transform_0, window_bounds = array<i64: 32, 128>}, {transform_indices = @transform_1, window_bounds = array<i64: 32, 128>}, {transform_indices = @transform_2, window_bounds = array<i64: 1, 32, 128>}, {transform_indices = @transform_3, window_bounds = array<i64: 1, 32, 128>}]} {
    %c0_i32 = arith.constant 0 : i32
    %0 = arith.cmpi eq, %arg1, %c0_i32 : i32
    %1 = arith.extui %0 : i1 to i32
    %c0_i32_0 = arith.constant 0 : i32
    %2 = arith.cmpi ne, %1, %c0_i32_0 : i32
    scf.if %2 {
      %cst = arith.constant 0.000000e+00 : f32
      %15 = vector.broadcast %cst : f32 to vector<1x32x128xf32>
      %c0 = arith.constant 0 : index
      %c0_6 = arith.constant 0 : index
      %c0_7 = arith.constant 0 : index
      %16 = vector.load %arg4[%c0, %c0_6, %c0_7] : memref<1x32x128xf32, #tpu.memory_space<vmem>>, vector<1x32x128xf32>
      tpu.vector_store %arg4[%c0, %c0_6, %c0_7], %15 {strides = array<i32>} : memref<1x32x128xf32, #tpu.memory_space<vmem>>, vector<1x32x128xf32>,
      %cst_8 = arith.constant 0.000000e+00 : f32
      %17 = vector.broadcast %cst_8 : f32 to vector<1x32x128xf32>
      %c0_9 = arith.constant 0 : index
      %c0_10 = arith.constant 0 : index
      %c0_11 = arith.constant 0 : index
      %18 = vector.load %arg5[%c0_9, %c0_10, %c0_11] : memref<1x32x128xf32, #tpu.memory_space<vmem>>, vector<1x32x128xf32>
      tpu.vector_store %arg5[%c0_9, %c0_10, %c0_11], %17 {strides = array<i32>} : memref<1x32x128xf32, #tpu.memory_space<vmem>>, vector<1x32x128xf32>,
    } else {
    }
    %c1_i32 = arith.constant 1 : i32
    %3 = arith.muli %arg0, %c1_i32 : i32
    %4 = arith.addi %3, %arg1 : i32
    %c32_i32 = arith.constant 32 : i32
    %5 = arith.muli %4, %c32_i32 : i32
    %c32_i32_1 = arith.constant 32 : i32
    %6 = arith.addi %5, %c32_i32_1 : i32
    %c32_i32_2 = arith.constant 32 : i32
    %7 = arith.cmpi sle, %6, %c32_i32_2 : i32
    %c32_i32_3 = arith.constant 32 : i32
    %8 = arith.cmpi slt, %5, %c32_i32_3 : i32
    %true = arith.constant true
    %9 = arith.xori %7, %true : i1
    %10 = arith.andi %8, %9 : i1
    %11 = arith.extui %7 : i1 to i32
    %c0_i32_4 = arith.constant 0 : i32
    %12 = arith.cmpi ne, %11, %c0_i32_4 : i32
    scf.if %12 {
      %c0 = arith.constant 0 : index
      %c0_6 = arith.constant 0 : index
      %15 = vector.load %arg3[%c0, %c0_6] : memref<32x128xf32, #tpu.memory_space<vmem>>, vector<32x128xf32>
      %c0_7 = arith.constant 0 : index
      %c0_8 = arith.constant 0 : index
      %16 = vector.load %arg2[%c0_7, %c0_8] : memref<32x128xf32, #tpu.memory_space<vmem>>, vector<32x128xf32>
      %cst = arith.constant 0.000000e+00 : f32
      %17 = vector.broadcast %cst : f32 to vector<32x128xf32>
      %18 = arith.cmpf ogt, %15, %17 : vector<32x128xf32>
      %cst_9 = arith.constant 1.000000e+00 : f32
      %19 = vector.broadcast %cst_9 : f32 to vector<32x128xf32>
      %20 = arith.select %18, %15, %19 : vector<32x128xi1>, vector<32x128xf32>
      %cst_10 = arith.constant 1.000000e+00 : f32
      %21 = vector.broadcast %cst_10 : f32 to vector<32x128xf32>
      %22 = arith.divf %21, %20 : vector<32x128xf32>
      %23 = arith.subf %16, %22 : vector<32x128xf32>
      %24 = math.absf %23 : vector<32x128xf32>
      %25 = arith.mulf %24, %24 : vector<32x128xf32>
      %cst_11 = arith.constant 0.000000e+00 : f32
      %26 = vector.broadcast %cst_11 : f32 to vector<32x128xf32>
      %27 = arith.select %18, %25, %26 : vector<32x128xi1>, vector<32x128xf32>
      %28 = arith.extui %18 : vector<32x128xi1> to vector<32x128xi32>
      %29 = arith.sitofp %28 : vector<32x128xi32> to vector<32x128xf32>
      %c0_12 = arith.constant 0 : index
      %c0_13 = arith.constant 0 : index
      %c0_14 = arith.constant 0 : index
      %30 = vector.load %arg4[%c0_12, %c0_13, %c0_14] : memref<1x32x128xf32, #tpu.memory_space<vmem>>, vector<1x32x128xf32>
      %31 = vector.shape_cast %27 : vector<32x128xf32> to vector<1x32x128xf32>
      %cst_15 = arith.constant dense<0.000000e+00> : vector<32x128xf32>
      %32 = vector.multi_reduction <add>, %31, %cst_15 [0] : vector<1x32x128xf32> to vector<32x128xf32>
      %33 = vector.shape_cast %32 : vector<32x128xf32> to vector<1x32x128xf32>
      %34 = arith.addf %30, %33 : vector<1x32x128xf32>
      %c0_16 = arith.constant 0 : index
      %c0_17 = arith.constant 0 : index
      %c0_18 = arith.constant 0 : index
      %35 = vector.load %arg4[%c0_16, %c0_17, %c0_18] : memref<1x32x128xf32, #tpu.memory_space<vmem>>, vector<1x32x128xf32>
      tpu.vector_store %arg4[%c0_16, %c0_17, %c0_18], %34 {strides = array<i32>} : memref<1x32x128xf32, #tpu.memory_space<vmem>>, vector<1x32x128xf32>,
      %c0_19 = arith.constant 0 : index
      %c0_20 = arith.constant 0 : index
      %c0_21 = arith.constant 0 : index
      %36 = vector.load %arg5[%c0_19, %c0_20, %c0_21] : memref<1x32x128xf32, #tpu.memory_space<vmem>>, vector<1x32x128xf32>
      %37 = vector.shape_cast %29 : vector<32x128xf32> to vector<1x32x128xf32>
      %cst_22 = arith.constant dense<0.000000e+00> : vector<32x128xf32>
      %38 = vector.multi_reduction <add>, %37, %cst_22 [0] : vector<1x32x128xf32> to vector<32x128xf32>
      %39 = vector.shape_cast %38 : vector<32x128xf32> to vector<1x32x128xf32>
      %40 = arith.addf %36, %39 : vector<1x32x128xf32>
      %c0_23 = arith.constant 0 : index
      %c0_24 = arith.constant 0 : index
      %c0_25 = arith.constant 0 : index
      %41 = vector.load %arg5[%c0_23, %c0_24, %c0_25] : memref<1x32x128xf32, #tpu.memory_space<vmem>>, vector<1x32x128xf32>
      tpu.vector_store %arg5[%c0_23, %c0_24, %c0_25], %40 {strides = array<i32>} : memref<1x32x128xf32, #tpu.memory_space<vmem>>, vector<1x32x128xf32>,
    } else {
    }
    %13 = arith.extui %10 : i1 to i32
    %c0_i32_5 = arith.constant 0 : i32
    %14 = arith.cmpi ne, %13, %c0_i32_5 : i32
    scf.if %14 {
      %c0 = arith.constant 0 : index
      %c0_6 = arith.constant 0 : index
      %15 = vector.load %arg3[%c0, %c0_6] : memref<32x128xf32, #tpu.memory_space<vmem>>, vector<32x128xf32>
      %c0_7 = arith.constant 0 : index
      %c0_8 = arith.constant 0 : index
      %16 = vector.load %arg2[%c0_7, %c0_8] : memref<32x128xf32, #tpu.memory_space<vmem>>, vector<32x128xf32>
      %17 = tpu.iota {dimensions = array<i32: 0>} : vector<32x128xi32>
      %18 = vector.broadcast %5 : i32 to vector<32x128xi32>
      %19 = arith.addi %18, %17 : vector<32x128xi32>
      %c32_i32_9 = arith.constant 32 : i32
      %20 = vector.broadcast %c32_i32_9 : i32 to vector<32x128xi32>
      %21 = arith.cmpi slt, %19, %20 : vector<32x128xi32>
      %cst = arith.constant 0.000000e+00 : f32
      %22 = vector.broadcast %cst : f32 to vector<32x128xf32>
      %23 = arith.cmpf ogt, %15, %22 : vector<32x128xf32>
      %24 = arith.andi %21, %23 : vector<32x128xi1>
      %cst_10 = arith.constant 1.000000e+00 : f32
      %25 = vector.broadcast %cst_10 : f32 to vector<32x128xf32>
      %26 = arith.select %24, %15, %25 : vector<32x128xi1>, vector<32x128xf32>
      %cst_11 = arith.constant 1.000000e+00 : f32
      %27 = vector.broadcast %cst_11 : f32 to vector<32x128xf32>
      %28 = arith.divf %27, %26 : vector<32x128xf32>
      %29 = arith.subf %16, %28 : vector<32x128xf32>
      %30 = math.absf %29 : vector<32x128xf32>
      %31 = arith.mulf %30, %30 : vector<32x128xf32>
      %cst_12 = arith.constant 0.000000e+00 : f32
      %32 = vector.broadcast %cst_12 : f32 to vector<32x128xf32>
      %33 = arith.select %24, %31, %32 : vector<32x128xi1>, vector<32x128xf32>
      %34 = arith.extui %24 : vector<32x128xi1> to vector<32x128xi32>
      %35 = arith.sitofp %34 : vector<32x128xi32> to vector<32x128xf32>
      %c0_13 = arith.constant 0 : index
      %c0_14 = arith.constant 0 : index
      %c0_15 = arith.constant 0 : index
      %36 = vector.load %arg4[%c0_13, %c0_14, %c0_15] : memref<1x32x128xf32, #tpu.memory_space<vmem>>, vector<1x32x128xf32>
      %37 = vector.shape_cast %33 : vector<32x128xf32> to vector<1x32x128xf32>
      %cst_16 = arith.constant dense<0.000000e+00> : vector<32x128xf32>
      %38 = vector.multi_reduction <add>, %37, %cst_16 [0] : vector<1x32x128xf32> to vector<32x128xf32>
      %39 = vector.shape_cast %38 : vector<32x128xf32> to vector<1x32x128xf32>
      %40 = arith.addf %36, %39 : vector<1x32x128xf32>
      %c0_17 = arith.constant 0 : index
      %c0_18 = arith.constant 0 : index
      %c0_19 = arith.constant 0 : index
      %41 = vector.load %arg4[%c0_17, %c0_18, %c0_19] : memref<1x32x128xf32, #tpu.memory_space<vmem>>, vector<1x32x128xf32>
      tpu.vector_store %arg4[%c0_17, %c0_18, %c0_19], %40 {strides = array<i32>} : memref<1x32x128xf32, #tpu.memory_space<vmem>>, vector<1x32x128xf32>,
      %c0_20 = arith.constant 0 : index
      %c0_21 = arith.constant 0 : index
      %c0_22 = arith.constant 0 : index
      %42 = vector.load %arg5[%c0_20, %c0_21, %c0_22] : memref<1x32x128xf32, #tpu.memory_space<vmem>>, vector<1x32x128xf32>
      %43 = vector.shape_cast %35 : vector<32x128xf32> to vector<1x32x128xf32>
      %cst_23 = arith.constant dense<0.000000e+00> : vector<32x128xf32>
      %44 = vector.multi_reduction <add>, %43, %cst_23 [0] : vector<1x32x128xf32> to vector<32x128xf32>
      %45 = vector.shape_cast %44 : vector<32x128xf32> to vector<1x32x128xf32>
      %46 = arith.addf %42, %45 : vector<1x32x128xf32>
      %c0_24 = arith.constant 0 : index
      %c0_25 = arith.constant 0 : index
      %c0_26 = arith.constant 0 : index
      %47 = vector.load %arg5[%c0_24, %c0_25, %c0_26] : memref<1x32x128xf32, #tpu.memory_space<vmem>>, vector<1x32x128xf32>
      tpu.vector_store %arg5[%c0_24, %c0_25, %c0_26], %46 {strides = array<i32>} : memref<1x32x128xf32, #tpu.memory_space<vmem>>, vector<1x32x128xf32>,
    } else {
    }
    return
  }
  func.func @transform_0(%arg0: i32, %arg1: i32) -> (i32, i32) {
    %c1_i32 = arith.constant 1 : i32
    %0 = arith.muli %arg0, %c1_i32 : i32
    %1 = arith.addi %0, %arg1 : i32
    %c0_i32 = arith.constant 0 : i32
    %2 = arith.minsi %1, %c0_i32 : i32
    %c0_i32_0 = arith.constant 0 : i32
    %c0_i32_1 = arith.constant 0 : i32
    return %2, %c0_i32_0 : i32, i32
  }
  func.func @transform_1(%arg0: i32, %arg1: i32) -> (i32, i32) {
    %c1_i32 = arith.constant 1 : i32
    %0 = arith.muli %arg0, %c1_i32 : i32
    %1 = arith.addi %0, %arg1 : i32
    %c0_i32 = arith.constant 0 : i32
    %2 = arith.minsi %1, %c0_i32 : i32
    %c0_i32_0 = arith.constant 0 : i32
    %c0_i32_1 = arith.constant 0 : i32
    return %2, %c0_i32_0 : i32, i32
  }
  func.func @transform_2(%arg0: i32, %arg1: i32) -> (i32, i32, i32) {
    %c0_i32 = arith.constant 0 : i32
    %c0_i32_0 = arith.constant 0 : i32
    %c0_i32_1 = arith.constant 0 : i32
    return %arg0, %c0_i32, %c0_i32_0 : i32, i32, i32
  }
  func.func @transform_3(%arg0: i32, %arg1: i32) -> (i32, i32, i32) {
    %c0_i32 = arith.constant 0 : i32
    %c0_i32_0 = arith.constant 0 : i32
    %c0_i32_1 = arith.constant 0 : i32
    return %arg0, %c0_i32, %c0_i32_0 : i32, i32, i32
  }
}

</mosaic_0001>

<llo_original>
// kernel: disparity_loss.1
$region0: #{disparity_loss.1}
  #allocation0 [shape = 'u32[]', space=smem, size = 0x4, offset = 0x4, fixed_abs, tag = 'smem constant byte address 0x4 - core index']
  #allocation1 [shape = 'u32[72,128]{1,0:T(1,128)}', space=vmem, size = 0x9000, scoped, tag = 'internal scratch']
  %s0 = inlined_call_operand.vmem [shape: f32[32,128], index: 0, kind: input, shape index: {}]
  %s1 = inlined_call_operand.vmem [shape: f32[32,128], index: 1, kind: input, shape index: {}]
  %s2 = inlined_call_operand.vmem [shape: f32[1,32,128], index: 2, kind: output, shape index: {0}]
  %s3 = inlined_call_operand.vmem [shape: f32[1,32,128], index: 3, kind: output, shape index: {1}]
  %4 = xla_tuple %s2, %s3
  %s5 = sld [smem:[#allocation0]]
  $region38: #{disparity_loss.1} parent=0
    _
  %s7 = ssub.s32 1, %s5
  %s8 = scalar_select 0, %s7, %s5
  // Predicated region
  $region2: #{disparity_loss.1} parent=0 // pred_check
    _
  $region3: #{disparity_loss.1} parent=0 // pred_check_branch
    %10 = sbr.rel (0) target = $region5
  $region4: #{disparity_loss.1} parent=0 // pred_region
    %s11 = sadd.s32 0, 0
    %p12 = scmp.lt.s32.totalorder %s11, 0
    %s13 = scalar_select %p12, %s11, 0
    %s14 = smul.u32 4, %s13
    %p15 = scmp.lt.s32.totalorder %s14, 3
    %s16 = scalar_select %p15, %s14, 3
    %s17 = smul.addr %s16, 8
    %s18 = scalar_lea.vmem %s0, %s17
    %s19 = sadd.s32 0, 0
    %p20 = scmp.lt.s32.totalorder %s19, 0
    %s21 = scalar_select %p20, %s19, 0
    %s22 = smul.u32 4, %s21
  $region5: #{disparity_loss.1} parent=0 // pred_fallthru
    _
  // Predicated region
  $region6: #{disparity_loss.1} parent=0 // pred_check
    _
  $region7: #{disparity_loss.1} parent=0 // pred_check_branch
    %24 = sbr.rel (0) target = $region9
  $region8: #{disparity_loss.1} parent=0 // pred_region
    %s25 = sadd.s32 0, 0
    %p26 = scmp.lt.s32.totalorder %s25, 0
    %s27 = scalar_select %p26, %s25, 0
    %s28 = smul.u32 4, %s27
    %p29 = scmp.lt.s32.totalorder %s28, 3
    %s30 = scalar_select %p29, %s28, 3
    %s31 = smul.addr %s30, 8
    %s32 = scalar_lea.vmem %s1, %s31
    %s33 = sadd.s32 0, 0
    %p34 = scmp.lt.s32.totalorder %s33, 0
    %s35 = scalar_select %p34, %s33, 0
    %s36 = smul.u32 4, %s35
  $region9: #{disparity_loss.1} parent=0 // pred_fallthru
    _
  %s37 = sadd.s32 0, 0
  %p38 = scmp.lt.s32.totalorder %s37, 0
  %s39 = scalar_select %p38, %s37, 0
  %s40 = smul.u32 4, %s39
  %p41 = scmp.lt.s32.totalorder %s40, 3
  %s42 = scalar_select %p41, %s40, 3
  %s43 = smul.addr %s42, 8
  %s44 = scalar_lea.vmem %s0, %s43
  %s45 = sadd.s32 0, 0
  %p46 = scmp.lt.s32.totalorder %s45, 0
  %s47 = scalar_select %p46, %s45, 0
  %s48 = smul.u32 4, %s47
  %p49 = scmp.lt.s32.totalorder %s48, 3
  %s50 = scalar_select %p49, %s48, 3
  %s51 = smul.addr %s50, 8
  %s52 = scalar_lea.vmem %s1, %s51
  %s53 = sadd.s32 0, 0
  %p54 = scmp.lt.s32.totalorder %s53, 0
  %s55 = scalar_select %p54, %s53, 0
  %s56 = smul.u32 4, %s55
  %p57 = scmp.lt.s32.totalorder %s56, 3
  %s58 = scalar_select %p57, %s56, 3
  %s59 = smul.addr %s58, 8
  %s60 = scalar_lea.vmem %s0, %s59
  %s61 = sadd.s32 0, 0
  %p62 = scmp.lt.s32.totalorder %s61, 0
  %s63 = scalar_select %p62, %s61, 0
  %s64 = smul.u32 4, %s63
  %s65 = sadd.s32 0, 0
  %p66 = scmp.lt.s32.totalorder %s65, 0
  %s67 = scalar_select %p66, %s65, 0
  %s68 = smul.u32 4, %s67
  %p69 = scmp.lt.s32.totalorder %s68, 3
  %s70 = scalar_select %p69, %s68, 3
  %s71 = smul.addr %s70, 8
  %s72 = scalar_lea.vmem %s1, %s71
  %s73 = sadd.s32 0, 0
  %p74 = scmp.lt.s32.totalorder %s73, 0
  %s75 = scalar_select %p74, %s73, 0
  %s76 = smul.u32 4, %s75
  %p77 = scmp.eq.s32.totalorder 0, 0
  // Predicated region
  $region10: #{disparity_loss.1} parent=0 // pred_check
    %p78 = pneg %p77
  $region11: #{disparity_loss.1} parent=0 // pred_check_branch
    %80 = sbr.rel (%p78) target = $region13
  $region12: #{disparity_loss.1} parent=0 // pred_region
    %81 = vst [vmem:[%s2] sm:$0xff] 0.0
    %82 = vst [vmem:[%s2 + $0x8] sm:$0xff] 0.0
    %83 = vst [vmem:[%s2 + $0x10] sm:$0xff] 0.0
    %84 = vst [vmem:[%s2 + $0x18] sm:$0xff] 0.0
    %85 = vst [vmem:[%s3] sm:$0xff] 0.0
    %86 = vst [vmem:[%s3 + $0x8] sm:$0xff] 0.0
    %87 = vst [vmem:[%s3 + $0x10] sm:$0xff] 0.0
    %88 = vst [vmem:[%s3 + $0x18] sm:$0xff] 0.0
  $region13: #{disparity_loss.1} parent=0 // pred_fallthru
    _
  %s89 = sadd.s32 0, 0
  %s90 = smul.u32 %s89, 32
  %s91 = sadd.s32 %s90, 32
  %p92 = scmp.le.s32.totalorder %s91, 32
  %p93 = scmp.lt.s32.totalorder %s90, 32
  %p94 = scmp.gt.s32.totalorder %s91, 32
  %p95 = pnand %p93, %p94
  %p96 = pneg %p95
  // Predicated region
  $region14: #{disparity_loss.1} parent=0 // pred_check
    %p97 = pneg %p92
  $region15: #{disparity_loss.1} parent=0 // pred_check_branch
    %99 = sbr.rel (%p97) target = $region17
  $region16: #{disparity_loss.1} parent=0 // pred_region
    %v100 = vld [vmem:[%s72] sm:$0xff]
    %v101 = vld [vmem:[%s72 + $0x8] sm:$0xff]
    %v102 = vld [vmem:[%s72 + $0x10] sm:$0xff]
    %v103 = vld [vmem:[%s72 + $0x18] sm:$0xff]
    %v104 = vld [vmem:[%s60] sm:$0xff]
    %v105 = vld [vmem:[%s60 + $0x8] sm:$0xff]
    %v106 = vld [vmem:[%s60 + $0x10] sm:$0xff]
    %v107 = vld [vmem:[%s60 + $0x18] sm:$0xff]
    %vm108 = vcmp.gt.f32.partialorder %v100, 0.0
    %vm109 = vcmp.gt.f32.partialorder %v101, 0.0
    %vm110 = vcmp.gt.f32.partialorder %v102, 0.0
    %vm111 = vcmp.gt.f32.partialorder %v103, 0.0
    %v112 = vsel %vm108, %v100, 1.0
    %v113 = vsel %vm109, %v101, 1.0
    %v114 = vsel %vm110, %v102, 1.0
    %v115 = vsel %vm111, %v103, 1.0
    %v116 = vrcp.pop %v112
    %v117 = vmul.f32 %v112, %v116
    %v118 = vsub.f32 1.0, %v117
    %v119 = vmul.f32 %v116, %v118
    %v120 = vadd.f32 %v116, %v119
    %vm121 = vweird.f32 %v112
    %vm122 = vweird.f32 %v116
    %vm123 = vmor %vm121, %vm122
    %v124 = vsel %vm123, %v116, %v120
    %v125 = vand.u32 2147483647, %v112
    %vm126 = vcmp.eq.f32.partialorder %v125, 8.507059e+37
    %v127 = vand.u32 %v112, 2147483648
    %v128 = vor.u32 1.1754944e-38, %v127
    %v129 = vsel %vm126, %v128, %v124
    %v130 = vmul.f32 1.0, %v129
    %v131 = vrcp.pop %v113
    %v132 = vmul.f32 %v113, %v131
    %v133 = vsub.f32 1.0, %v132
    %v134 = vmul.f32 %v131, %v133
    %v135 = vadd.f32 %v131, %v134
    %vm136 = vweird.f32 %v113
    %vm137 = vweird.f32 %v131
    %vm138 = vmor %vm136, %vm137
    %v139 = vsel %vm138, %v131, %v135
    %v140 = vand.u32 2147483647, %v113
    %vm141 = vcmp.eq.f32.partialorder %v140, 8.507059e+37
    %v142 = vand.u32 %v113, 2147483648
    %v143 = vor.u32 1.1754944e-38, %v142
    %v144 = vsel %vm141, %v143, %v139
    %v145 = vmul.f32 1.0, %v144
    %v146 = vrcp.pop %v114
    %v147 = vmul.f32 %v114, %v146
    %v148 = vsub.f32 1.0, %v147
    %v149 = vmul.f32 %v146, %v148
    %v150 = vadd.f32 %v146, %v149
    %vm151 = vweird.f32 %v114
    %vm152 = vweird.f32 %v146
    %vm153 = vmor %vm151, %vm152
    %v154 = vsel %vm153, %v146, %v150
    %v155 = vand.u32 2147483647, %v114
    %vm156 = vcmp.eq.f32.partialorder %v155, 8.507059e+37
    %v157 = vand.u32 %v114, 2147483648
    %v158 = vor.u32 1.1754944e-38, %v157
    %v159 = vsel %vm156, %v158, %v154
    %v160 = vmul.f32 1.0, %v159
    %v161 = vrcp.pop %v115
    %v162 = vmul.f32 %v115, %v161
    %v163 = vsub.f32 1.0, %v162
    %v164 = vmul.f32 %v161, %v163
    %v165 = vadd.f32 %v161, %v164
    %vm166 = vweird.f32 %v115
    %vm167 = vweird.f32 %v161
    %vm168 = vmor %vm166, %vm167
    %v169 = vsel %vm168, %v161, %v165
    %v170 = vand.u32 2147483647, %v115
    %vm171 = vcmp.eq.f32.partialorder %v170, 8.507059e+37
    %v172 = vand.u32 %v115, 2147483648
    %v173 = vor.u32 1.1754944e-38, %v172
    %v174 = vsel %vm171, %v173, %v169
    %v175 = vmul.f32 1.0, %v174
    %v176 = vsub.f32 %v104, %v130
    %v177 = vsub.f32 %v105, %v145
    %v178 = vsub.f32 %v106, %v160
    %v179 = vsub.f32 %v107, %v175
    %v180 = vand.u32 2147483647, %v176
    %v181 = vand.u32 2147483647, %v177
    %v182 = vand.u32 2147483647, %v178
    %v183 = vand.u32 2147483647, %v179
    %v184 = vmul.f32 %v180, %v180
    %v185 = vmul.f32 %v181, %v181
    %v186 = vmul.f32 %v182, %v182
    %v187 = vmul.f32 %v183, %v183
    %v188 = vsel %vm108, %v184, 0.0
    %v189 = vsel %vm109, %v185, 0.0
    %v190 = vsel %vm110, %v186, 0.0
    %v191 = vsel %vm111, %v187, 0.0
    %v192 = vsel %vm108, 1, 0
    %v193 = vsel %vm109, 1, 0
    %v194 = vsel %vm110, 1, 0
    %v195 = vsel %vm111, 1, 0
    %v196 = vcvt.s32.f32 %v192
    %v197 = vcvt.s32.f32 %v193
    %v198 = vcvt.s32.f32 %v194
    %v199 = vcvt.s32.f32 %v195
    %v200 = vld [vmem:[%s2] sm:$0xff]
    %v201 = vld [vmem:[%s2 + $0x8] sm:$0xff]
    %v202 = vld [vmem:[%s2 + $0x10] sm:$0xff]
    %v203 = vld [vmem:[%s2 + $0x18] sm:$0xff]
    %v204 = vadd.f32 %v188, 0.0
    %v205 = vadd.f32 %v189, 0.0
    %v206 = vadd.f32 %v190, 0.0
    %v207 = vadd.f32 %v191, 0.0
    %v208 = vadd.f32 %v200, %v204
    %v209 = vadd.f32 %v201, %v205
    %v210 = vadd.f32 %v202, %v206
    %v211 = vadd.f32 %v203, %v207
    %212 = vst [vmem:[%s2] sm:$0xff] %v208
    %213 = vst [vmem:[%s2 + $0x8] sm:$0xff] %v209
    %214 = vst [vmem:[%s2 + $0x10] sm:$0xff] %v210
    %215 = vst [vmem:[%s2 + $0x18] sm:$0xff] %v211
    %v216 = vld [vmem:[%s3] sm:$0xff]
    %v217 = vld [vmem:[%s3 + $0x8] sm:$0xff]
    %v218 = vld [vmem:[%s3 + $0x10] sm:$0xff]
    %v219 = vld [vmem:[%s3 + $0x18] sm:$0xff]
    %v220 = vadd.f32 %v196, 0.0
    %v221 = vadd.f32 %v197, 0.0
    %v222 = vadd.f32 %v198, 0.0
    %v223 = vadd.f32 %v199, 0.0
    %v224 = vadd.f32 %v216, %v220
    %v225 = vadd.f32 %v217, %v221
    %v226 = vadd.f32 %v218, %v222
    %v227 = vadd.f32 %v219, %v223
    %228 = vst [vmem:[%s3] sm:$0xff] %v224
    %229 = vst [vmem:[%s3 + $0x8] sm:$0xff] %v225
    %230 = vst [vmem:[%s3 + $0x10] sm:$0xff] %v226
    %231 = vst [vmem:[%s3 + $0x18] sm:$0xff] %v227
  $region17: #{disparity_loss.1} parent=0 // pred_fallthru
    _
  // Predicated region
  $region18: #{disparity_loss.1} parent=0 // pred_check
    _
  $region19: #{disparity_loss.1} parent=0 // pred_check_branch
    %233 = sbr.rel (%p95) target = $region21
  $region20: #{disparity_loss.1} parent=0 // pred_region
    %v234 = vld [vmem:[%s72] sm:$0xff]
    %v235 = vld [vmem:[%s72 + $0x8] sm:$0xff]
    %v236 = vld [vmem:[%s72 + $0x10] sm:$0xff]
    %v237 = vld [vmem:[%s72 + $0x18] sm:$0xff]
    %v238 = vld [vmem:[%s60] sm:$0xff]
    %v239 = vld [vmem:[%s60 + $0x8] sm:$0xff]
    %v240 = vld [vmem:[%s60 + $0x10] sm:$0xff]
    %v241 = vld [vmem:[%s60 + $0x18] sm:$0xff]
    %v242 = vlaneseq
    %v243 = vshrl.u32 %v242, 7
    %v244 = vadd.s32 %v243, 8
    %v245 = vadd.s32 %v243, 16
    %v246 = vadd.s32 %v243, 24
    %v247 = vstv %s90
    %v248 = vadd.s32 %v247, %v243
    %v249 = vadd.s32 %v247, %v244
    %v250 = vadd.s32 %v247, %v245
    %v251 = vadd.s32 %v247, %v246
    %vm252 = vcmp.lt.s32.totalorder %v248, 32
    %vm253 = vcmp.lt.s32.totalorder %v249, 32
    %vm254 = vcmp.lt.s32.totalorder %v250, 32
    %vm255 = vcmp.lt.s32.totalorder %v251, 32
    %vm256 = vcmp.gt.f32.partialorder %v234, 0.0
    %vm257 = vcmp.gt.f32.partialorder %v235, 0.0
    %vm258 = vcmp.gt.f32.partialorder %v236, 0.0
    %vm259 = vcmp.gt.f32.partialorder %v237, 0.0
    %vm260 = vmand %vm252, %vm256
    %vm261 = vmand %vm253, %vm257
    %vm262 = vmand %vm254, %vm258
    %vm263 = vmand %vm255, %vm259
    %v264 = vsel %vm260, %v234, 1.0
    %v265 = vsel %vm261, %v235, 1.0
    %v266 = vsel %vm262, %v236, 1.0
    %v267 = vsel %vm263, %v237, 1.0
    %v268 = vrcp.pop %v264
    %v269 = vmul.f32 %v264, %v268
    %v270 = vsub.f32 1.0, %v269
    %v271 = vmul.f32 %v268, %v270
    %v272 = vadd.f32 %v268, %v271
    %vm273 = vweird.f32 %v264
    %vm274 = vweird.f32 %v268
    %vm275 = vmor %vm273, %vm274
    %v276 = vsel %vm275, %v268, %v272
    %v277 = vand.u32 2147483647, %v264
    %vm278 = vcmp.eq.f32.partialorder %v277, 8.507059e+37
    %v279 = vand.u32 %v264, 2147483648
    %v280 = vor.u32 1.1754944e-38, %v279
    %v281 = vsel %vm278, %v280, %v276
    %v282 = vmul.f32 1.0, %v281
    %v283 = vrcp.pop %v265
    %v284 = vmul.f32 %v265, %v283
    %v285 = vsub.f32 1.0, %v284
    %v286 = vmul.f32 %v283, %v285
    %v287 = vadd.f32 %v283, %v286
    %vm288 = vweird.f32 %v265
    %vm289 = vweird.f32 %v283
    %vm290 = vmor %vm288, %vm289
    %v291 = vsel %vm290, %v283, %v287
    %v292 = vand.u32 2147483647, %v265
    %vm293 = vcmp.eq.f32.partialorder %v292, 8.507059e+37
    %v294 = vand.u32 %v265, 2147483648
    %v295 = vor.u32 1.1754944e-38, %v294
    %v296 = vsel %vm293, %v295, %v291
    %v297 = vmul.f32 1.0, %v296
    %v298 = vrcp.pop %v266
    %v299 = vmul.f32 %v266, %v298
    %v300 = vsub.f32 1.0, %v299
    %v301 = vmul.f32 %v298, %v300
    %v302 = vadd.f32 %v298, %v301
    %vm303 = vweird.f32 %v266
    %vm304 = vweird.f32 %v298
    %vm305 = vmor %vm303, %vm304
    %v306 = vsel %vm305, %v298, %v302
    %v307 = vand.u32 2147483647, %v266
    %vm308 = vcmp.eq.f32.partialorder %v307, 8.507059e+37
    %v309 = vand.u32 %v266, 2147483648
    %v310 = vor.u32 1.1754944e-38, %v309
    %v311 = vsel %vm308, %v310, %v306
    %v312 = vmul.f32 1.0, %v311
    %v313 = vrcp.pop %v267
    %v314 = vmul.f32 %v267, %v313
    %v315 = vsub.f32 1.0, %v314
    %v316 = vmul.f32 %v313, %v315
    %v317 = vadd.f32 %v313, %v316
    %vm318 = vweird.f32 %v267
    %vm319 = vweird.f32 %v313
    %vm320 = vmor %vm318, %vm319
    %v321 = vsel %vm320, %v313, %v317
    %v322 = vand.u32 2147483647, %v267
    %vm323 = vcmp.eq.f32.partialorder %v322, 8.507059e+37
    %v324 = vand.u32 %v267, 2147483648
    %v325 = vor.u32 1.1754944e-38, %v324
    %v326 = vsel %vm323, %v325, %v321
    %v327 = vmul.f32 1.0, %v326
    %v328 = vsub.f32 %v238, %v282
    %v329 = vsub.f32 %v239, %v297
    %v330 = vsub.f32 %v240, %v312
    %v331 = vsub.f32 %v241, %v327
    %v332 = vand.u32 2147483647, %v328
    %v333 = vand.u32 2147483647, %v329
    %v334 = vand.u32 2147483647, %v330
    %v335 = vand.u32 2147483647, %v331
    %v336 = vmul.f32 %v332, %v332
    %v337 = vmul.f32 %v333, %v333
    %v338 = vmul.f32 %v334, %v334
    %v339 = vmul.f32 %v335, %v335
    %v340 = vsel %vm260, %v336, 0.0
    %v341 = vsel %vm261, %v337, 0.0
    %v342 = vsel %vm262, %v338, 0.0
    %v343 = vsel %vm263, %v339, 0.0
    %v344 = vsel %vm260, 1, 0
    %v345 = vsel %vm261, 1, 0
    %v346 = vsel %vm262, 1, 0
    %v347 = vsel %vm263, 1, 0
    %v348 = vcvt.s32.f32 %v344
    %v349 = vcvt.s32.f32 %v345
    %v350 = vcvt.s32.f32 %v346
    %v351 = vcvt.s32.f32 %v347
    %v352 = vld [vmem:[%s2] sm:$0xff]
    %v353 = vld [vmem:[%s2 + $0x8] sm:$0xff]
    %v354 = vld [vmem:[%s2 + $0x10] sm:$0xff]
    %v355 = vld [vmem:[%s2 + $0x18] sm:$0xff]
    %v356 = vadd.f32 %v340, 0.0
    %v357 = vadd.f32 %v341, 0.0
    %v358 = vadd.f32 %v342, 0.0
    %v359 = vadd.f32 %v343, 0.0
    %v360 = vadd.f32 %v352, %v356
    %v361 = vadd.f32 %v353, %v357
    %v362 = vadd.f32 %v354, %v358
    %v363 = vadd.f32 %v355, %v359
    %364 = vst [vmem:[%s2] sm:$0xff] %v360
    %365 = vst [vmem:[%s2 + $0x8] sm:$0xff] %v361
    %366 = vst [vmem:[%s2 + $0x10] sm:$0xff] %v362
    %367 = vst [vmem:[%s2 + $0x18] sm:$0xff] %v363
    %v368 = vld [vmem:[%s3] sm:$0xff]
    %v369 = vld [vmem:[%s3 + $0x8] sm:$0xff]
    %v370 = vld [vmem:[%s3 + $0x10] sm:$0xff]
    %v371 = vld [vmem:[%s3 + $0x18] sm:$0xff]
    %v372 = vadd.f32 %v348, 0.0
    %v373 = vadd.f32 %v349, 0.0
    %v374 = vadd.f32 %v350, 0.0
    %v375 = vadd.f32 %v351, 0.0
    %v376 = vadd.f32 %v368, %v372
    %v377 = vadd.f32 %v369, %v373
    %v378 = vadd.f32 %v370, %v374
    %v379 = vadd.f32 %v371, %v375
    %380 = vst [vmem:[%s3] sm:$0xff] %v376
    %381 = vst [vmem:[%s3 + $0x8] sm:$0xff] %v377
    %382 = vst [vmem:[%s3 + $0x10] sm:$0xff] %v378
    %383 = vst [vmem:[%s3 + $0x18] sm:$0xff] %v379
  $region21: #{disparity_loss.1} parent=0 // pred_fallthru
    _
  // Predicated region
  $region22: #{disparity_loss.1} parent=0 // pred_check
    _
  $region23: #{disparity_loss.1} parent=0 // pred_check_branch
    %385 = sbr.rel (0) target = $region25
  $region24: #{disparity_loss.1} parent=0 // pred_region
    _
  $region25: #{disparity_loss.1} parent=0 // pred_fallthru
    _
  // Predicated region
  $region26: #{disparity_loss.1} parent=0 // pred_check
    _
  $region27: #{disparity_loss.1} parent=0 // pred_check_branch
    %387 = sbr.rel (0) target = $region29
  $region28: #{disparity_loss.1} parent=0 // pred_region
    _
  $region29: #{disparity_loss.1} parent=0 // pred_fallthru
    _
  // Predicated region
  $region30: #{disparity_loss.1} parent=0 // pred_check
    _
  $region31: #{disparity_loss.1} parent=0 // pred_check_branch
    %389 = sbr.rel (0) target = $region33
  $region32: #{disparity_loss.1} parent=0 // pred_region
    _
  $region33: #{disparity_loss.1} parent=0 // pred_fallthru
    _
  // Predicated region
  $region34: #{disparity_loss.1} parent=0 // pred_check
    _
  $region35: #{disparity_loss.1} parent=0 // pred_check_branch
    %391 = sbr.rel (0) target = $region37
  $region36: #{disparity_loss.1} parent=0 // pred_region
    _
  $region37: #{disparity_loss.1} parent=0 // pred_fallthru
    _

</llo_original>
